<compile_context>
chip_gen: v7x
topology: tpu7x:2x2x1
jax: 0.10.0
libtpu: 0.0.40
codegen_flags: <defaults>
</compile_context>

<pallas_src>
import math
import jax
import jax.numpy as jnp
from jax import lax
from jax.experimental import pallas as pl
from jax.experimental.pallas import tpu as pltpu

EPS = 1e-5
LEAKY_SLOPE = 0.1
LANES = 128


def _fused_decoder_kernel(den_ref,                         # SMEM (63,) f32: 3 x [w1(12), b1(4), w2(4), b2(1)]
                          hL_ref, zt_ref, W_ref, side_ref,  # VMEM inputs
                          zbn_ref):                         # VMEM output (3, B, Dp)
    # side rows: [bias_stage1, bias_stage2, mu_s0, mu_s1, mu_s2, var_s0, var_s1, var_s2]
    side = side_ref[...]                                    # (8, Dp) -- one vreg-sized slab
    z_hat = hL_ref[...]                                     # (B, Dp)

    for s in range(3):                                      # fully unrolled: 3 stages, 1 kernel
        # ---- decoder fc: Linear (stages 1,2) or identity (stage 0 is BN-only) ----
        if s == 0:
            lin = z_hat
        else:
            lin = jnp.dot(z_hat, W_ref[s - 1],
                          preferred_element_type=jnp.float32) + side[s - 1:s, :]

        # ---- BatchNorm1d(affine=False), training mode: batch mean + biased variance ----
        mean = jnp.mean(lin, axis=0, keepdims=True)
        var_b = jnp.mean((lin - mean) ** 2, axis=0, keepdims=True)
        u = (lin - mean) * lax.rsqrt(var_b + EPS)

        z = zt_ref[s]
        uz = u * z

        # ---- Denoiser_MLP: Linear(3,4) -> LeakyReLU(0.1) -> Linear(4,1), pure VPU ----
        base = 21 * s
        acc = None
        for k in range(4):
            r = (u * den_ref[base + 3 * k + 0]
                 + z * den_ref[base + 3 * k + 1]
                 + uz * den_ref[base + 3 * k + 2]
                 + den_ref[base + 12 + k])
            r = jnp.where(r >= 0.0, r, LEAKY_SLOPE * r)     # LeakyReLU(0.1)
            t = r * den_ref[base + 16 + k]
            acc = t if acc is None else acc + t
        z_hat = acc + den_ref[base + 20]                    # add b2 once

        # ---- final per-layer normalization with externally supplied (mu, var) ----
        mu = side[2 + s:3 + s, :]
        var = side[5 + s:6 + s, :]
        zbn_ref[s] = (z_hat - mu) * lax.rsqrt(var + EPS)


def _pad_to(x, shape, fill=0.0):
    out = jnp.full(shape, fill, x.dtype)
    return out.at[tuple(slice(0, s) for s in x.shape)].set(x)


def hld_decoder_forward(params, h_L, h_list, stat_list):
    """Mirrors HLD_Decoder.forward; returns [z_bn_0, z_bn_1, z_bn_2]."""
    B, hidden_dim = h_L.shape
    h_len = len(h_list)
    # per-stage output feature dims: BN-only, Linear(H,H), Linear(H,input_dim)
    d_out = [hidden_dim,
             params["decoder"][1][0].shape[1],
             params["decoder"][2][0].shape[1]]
    Dp = LANES * pl.cdiv(max(max(d_out), hidden_dim), LANES)
    f32 = jnp.float32

    hL_pad = _pad_to(h_L.astype(f32), (B, Dp))
    # z_tilde per stage (stage i uses h_list[h_len - 1 - i]), padded & stacked
    zt = jnp.stack([_pad_to(h_list[h_len - 1 - i].astype(f32), (B, Dp)) for i in range(3)])
    # decoder Linear weights for stages 1 and 2 only (stage 0 is BN-only)
    W_stack = jnp.stack([_pad_to(params["decoder"][i][0].astype(f32), (Dp, Dp)) for i in (1, 2)])

    # one (8, Dp) slab: bias1, bias2, mu x3, var x3   (var padded with 1.0)
    side_rows = [
        _pad_to(params["decoder"][1][1].reshape(1, -1).astype(f32), (1, Dp)),
        _pad_to(params["decoder"][2][1].reshape(1, -1).astype(f32), (1, Dp)),
    ]
    for i in range(3):
        mu, _ = stat_list[h_len - 1 - i]
        side_rows.append(_pad_to(mu.reshape(1, -1).astype(f32), (1, Dp)))
    for i in range(3):
        _, var = stat_list[h_len - 1 - i]
        side_rows.append(_pad_to(var.reshape(1, -1).astype(f32), (1, Dp), fill=1.0))
    side = jnp.concatenate(side_rows, axis=0)               # (8, Dp)

    # 3 x 21 denoiser-MLP scalars, one flat SMEM array
    den_flat = jnp.concatenate(
        [jnp.concatenate([w1.reshape(-1), b1.reshape(-1), w2.reshape(-1), b2.reshape(-1)])
         for (w1, b1, w2, b2) in params["denoiser"]]).astype(f32)   # (63,)

    smem = pl.BlockSpec(memory_space=pltpu.MemorySpace.SMEM)
    vmem = pl.BlockSpec(memory_space=pltpu.MemorySpace.VMEM)
    zbn = pl.pallas_call(
        _fused_decoder_kernel,
        out_shape=jax.ShapeDtypeStruct((3, B, Dp), f32),
        in_specs=[smem, vmem, vmem, vmem, vmem],
        out_specs=vmem,
    )(den_flat, hL_pad, zt, W_stack, side)

    return [zbn[i, :, :d_out[i]] for i in range(3)]


# ---------------------------- pure-JAX reference ----------------------------
def _ref_stage(z_hat, Wb, z_tilde, mu, var, w1, b1, w2, b2):
    if Wb is None:                                          # stage 0: BatchNorm only
        lin = z_hat
    else:
        W, bias = Wb
        lin = z_hat @ W + bias.reshape(1, -1)
    mean = jnp.mean(lin, axis=0, keepdims=True)
    var_b = jnp.mean((lin - mean) ** 2, axis=0, keepdims=True)
    u = (lin - mean) / jnp.sqrt(var_b + EPS)
    h = jnp.stack([u, z_tilde, u * z_tilde], axis=2)        # (B, D, 3)
    r = h @ w1.T + b1                                       # (B, D, 4)
    r = jnp.where(r >= 0.0, r, LEAKY_SLOPE * r)
    z_hat_next = (r @ w2.T + b2)[..., 0]                    # (B, D)
    z_bn = (z_hat_next - mu.reshape(1, -1)) / jnp.sqrt(var.reshape(1, -1) + EPS)
    return z_bn, z_hat_next


def hld_decoder_reference(params, h_L, h_list, stat_list):
    h_len = len(h_list)
    zbn_out = []
    z_hat = h_L
    for i in range(3):
        Wb = params["decoder"][i]
        w1, b1, w2, b2 = params["denoiser"][i]
        z_tilde = h_list[h_len - 1 - i]
        mu, var = stat_list[h_len - 1 - i]
        z_bn, z_hat = _ref_stage(z_hat, Wb, z_tilde, mu, var, w1, b1, w2, b2)
        zbn_out.append(z_bn)
    return zbn_out


# ---------------------------- deterministic params ----------------------------
def _linear_init(key, fan_in, fan_out):
    # PyTorch default Linear init: U(-1/sqrt(fan_in), 1/sqrt(fan_in)); W stored (in, out).
    kw, kb = jax.random.split(key)
    bound = 1.0 / math.sqrt(fan_in)
    W = jax.random.uniform(kw, (fan_in, fan_out), jnp.float32, -bound, bound)
    b = jax.random.uniform(kb, (fan_out,), jnp.float32, -bound, bound)
    return W, b


def _denoiser_init(key):
    k1, k2, k3, k4 = jax.random.split(key, 4)
    b1w = 1.0 / math.sqrt(3.0)
    b2w = 1.0 / math.sqrt(4.0)
    w1 = jax.random.uniform(k1, (4, 3), jnp.float32, -b1w, b1w)   # torch layout (out, in)
    b1 = jax.random.uniform(k2, (4,), jnp.float32, -b1w, b1w)
    w2 = jax.random.uniform(k3, (1, 4), jnp.float32, -b2w, b2w)
    b2 = jax.random.uniform(k4, (1,), jnp.float32, -b2w, b2w)
    return w1, b1, w2, b2


def make_params(key, input_dim, hidden_dim):
    keys = jax.random.split(key, 5)
    # decoder[0] is BatchNorm only -> no Linear params (specialized in the kernel)
    dec1 = _linear_init(keys[0], hidden_dim, hidden_dim)
    dec2 = _linear_init(keys[1], hidden_dim, input_dim)
    den = [_denoiser_init(keys[2]), _denoiser_init(keys[3]), _denoiser_init(keys[4])]
    return {"decoder": [None, dec1, dec2], "denoiser": den}


if __name__ == "__main__":
    B, input_dim, hidden_dim = 8, 16, 32

    key = jax.random.PRNGKey(0)
    kp, k1, k2, k3, k4, k5, k6 = jax.random.split(key, 7)

    params = make_params(kp, input_dim, hidden_dim)

    h_L = jax.random.normal(k1, (B, hidden_dim), jnp.float32)
    # h_list ordered bottom-up (as in the ladder net): [input-level, hidden, hidden]
    h_list = [
        jax.random.normal(k2, (B, input_dim), jnp.float32),
        jax.random.normal(k3, (B, hidden_dim), jnp.float32),
        jax.random.normal(k4, (B, hidden_dim), jnp.float32),
    ]
    dims = [input_dim, hidden_dim, hidden_dim]
    mus = jax.random.normal(k5, (3, max(dims)), jnp.float32)
    vrs = jax.random.uniform(k6, (3, max(dims)), jnp.float32, 0.5, 1.5)
    stat_list = [(mus[j, :dims[j]], vrs[j, :dims[j]]) for j in range(3)]

    zbn_out = hld_decoder_forward(params, h_L, h_list, stat_list)
    zbn_out = [jax.block_until_ready(z) for z in zbn_out]

    zbn_ref = hld_decoder_reference(params, h_L, h_list, stat_list)
    for z, zr in zip(zbn_out, zbn_ref):
        assert z.shape == zr.shape
        assert jnp.allclose(z, zr, atol=1e-4, rtol=1e-4), "mismatch vs reference"

    print("KERNEL_OK")
</pallas_src>

<mosaic_0001>
module attributes {stable_mosaic.version = 11 : i64} {
  func.func @_fused_decoder_kernel(%arg0: memref<63xf32, #tpu.memory_space<smem>>, %arg1: memref<8x128xf32, #tpu.memory_space<vmem>>, %arg2: memref<3x8x128xf32, #tpu.memory_space<vmem>>, %arg3: memref<2x128x128xf32, #tpu.memory_space<vmem>>, %arg4: memref<8x128xf32, #tpu.memory_space<vmem>>, %arg5: memref<3x8x128xf32, #tpu.memory_space<vmem>>) attributes {dimension_semantics = [], scalar_prefetch = 0 : i64, scratch_operands = 0 : i64, tpu.core_type = #tpu.core_type<tc>} {
    %c0 = arith.constant 0 : index
    %c0_0 = arith.constant 0 : index
    %0 = vector.load %arg4[%c0, %c0_0] : memref<8x128xf32, #tpu.memory_space<vmem>>, vector<8x128xf32>
    %c0_1 = arith.constant 0 : index
    %c0_2 = arith.constant 0 : index
    %1 = vector.load %arg1[%c0_1, %c0_2] : memref<8x128xf32, #tpu.memory_space<vmem>>, vector<8x128xf32>
    %cst = arith.constant dense<0.000000e+00> : vector<128xf32>
    %2 = vector.multi_reduction <add>, %1, %cst [0] : vector<8x128xf32> to vector<128xf32>
    %3 = vector.shape_cast %2 : vector<128xf32> to vector<1x128xf32>
    %cst_3 = arith.constant 8.000000e+00 : f32
    %4 = vector.broadcast %cst_3 : f32 to vector<1x128xf32>
    %5 = arith.divf %3, %4 : vector<1x128xf32>
    %6 = vector.broadcast %5 : vector<1x128xf32> to vector<8x128xf32>
    %7 = arith.subf %1, %6 : vector<8x128xf32>
    %8 = arith.mulf %7, %7 : vector<8x128xf32>
    %cst_4 = arith.constant dense<0.000000e+00> : vector<128xf32>
    %9 = vector.multi_reduction <add>, %8, %cst_4 [0] : vector<8x128xf32> to vector<128xf32>
    %10 = vector.shape_cast %9 : vector<128xf32> to vector<1x128xf32>
    %cst_5 = arith.constant 8.000000e+00 : f32
    %11 = vector.broadcast %cst_5 : f32 to vector<1x128xf32>
    %12 = arith.divf %10, %11 : vector<1x128xf32>
    %13 = vector.broadcast %5 : vector<1x128xf32> to vector<8x128xf32>
    %14 = arith.subf %1, %13 : vector<8x128xf32>
    %cst_6 = arith.constant 9.99999974E-6 : f32
    %15 = vector.broadcast %cst_6 : f32 to vector<1x128xf32>
    %16 = arith.addf %12, %15 : vector<1x128xf32>
    %17 = math.rsqrt %16 : vector<1x128xf32>
    %18 = vector.broadcast %17 : vector<1x128xf32> to vector<8x128xf32>
    %19 = arith.mulf %14, %18 : vector<8x128xf32>
    %c0_7 = arith.constant 0 : index
    %c0_8 = arith.constant 0 : index
    %c0_9 = arith.constant 0 : index
    %20 = vector.load %arg2[%c0_7, %c0_8, %c0_9] : memref<3x8x128xf32, #tpu.memory_space<vmem>>, vector<1x8x128xf32>
    %21 = vector.shape_cast %20 : vector<1x8x128xf32> to vector<8x128xf32>
    %22 = arith.mulf %19, %21 : vector<8x128xf32>
    %c0_10 = arith.constant 0 : index
    %23 = memref.load %arg0[%c0_10] : memref<63xf32, #tpu.memory_space<smem>>
    %24 = vector.broadcast %23 : f32 to vector<8x128xf32>
    %25 = arith.mulf %19, %24 : vector<8x128xf32>
    %c1 = arith.constant 1 : index
    %26 = memref.load %arg0[%c1] : memref<63xf32, #tpu.memory_space<smem>>
    %27 = vector.broadcast %26 : f32 to vector<8x128xf32>
    %28 = arith.mulf %21, %27 : vector<8x128xf32>
    %29 = arith.addf %25, %28 : vector<8x128xf32>
    %c2 = arith.constant 2 : index
    %30 = memref.load %arg0[%c2] : memref<63xf32, #tpu.memory_space<smem>>
    %31 = vector.broadcast %30 : f32 to vector<8x128xf32>
    %32 = arith.mulf %22, %31 : vector<8x128xf32>
    %33 = arith.addf %29, %32 : vector<8x128xf32>
    %c12 = arith.constant 12 : index
    %34 = memref.load %arg0[%c12] : memref<63xf32, #tpu.memory_space<smem>>
    %35 = vector.broadcast %34 : f32 to vector<8x128xf32>
    %36 = arith.addf %33, %35 : vector<8x128xf32>
    %cst_11 = arith.constant 0.000000e+00 : f32
    %37 = vector.broadcast %cst_11 : f32 to vector<8x128xf32>
    %38 = arith.cmpf oge, %36, %37 : vector<8x128xf32>
    %cst_12 = arith.constant 1.000000e-01 : f32
    %39 = vector.broadcast %cst_12 : f32 to vector<8x128xf32>
    %40 = arith.mulf %39, %36 : vector<8x128xf32>
    %41 = arith.select %38, %36, %40 : vector<8x128xi1>, vector<8x128xf32>
    %c16 = arith.constant 16 : index
    %42 = memref.load %arg0[%c16] : memref<63xf32, #tpu.memory_space<smem>>
    %43 = vector.broadcast %42 : f32 to vector<8x128xf32>
    %44 = arith.mulf %41, %43 : vector<8x128xf32>
    %c3 = arith.constant 3 : index
    %45 = memref.load %arg0[%c3] : memref<63xf32, #tpu.memory_space<smem>>
    %46 = vector.broadcast %45 : f32 to vector<8x128xf32>
    %47 = arith.mulf %19, %46 : vector<8x128xf32>
    %c4 = arith.constant 4 : index
    %48 = memref.load %arg0[%c4] : memref<63xf32, #tpu.memory_space<smem>>
    %49 = vector.broadcast %48 : f32 to vector<8x128xf32>
    %50 = arith.mulf %21, %49 : vector<8x128xf32>
    %51 = arith.addf %47, %50 : vector<8x128xf32>
    %c5 = arith.constant 5 : index
    %52 = memref.load %arg0[%c5] : memref<63xf32, #tpu.memory_space<smem>>
    %53 = vector.broadcast %52 : f32 to vector<8x128xf32>
    %54 = arith.mulf %22, %53 : vector<8x128xf32>
    %55 = arith.addf %51, %54 : vector<8x128xf32>
    %c13 = arith.constant 13 : index
    %56 = memref.load %arg0[%c13] : memref<63xf32, #tpu.memory_space<smem>>
    %57 = vector.broadcast %56 : f32 to vector<8x128xf32>
    %58 = arith.addf %55, %57 : vector<8x128xf32>
    %cst_13 = arith.constant 0.000000e+00 : f32
    %59 = vector.broadcast %cst_13 : f32 to vector<8x128xf32>
    %60 = arith.cmpf oge, %58, %59 : vector<8x128xf32>
    %cst_14 = arith.constant 1.000000e-01 : f32
    %61 = vector.broadcast %cst_14 : f32 to vector<8x128xf32>
    %62 = arith.mulf %61, %58 : vector<8x128xf32>
    %63 = arith.select %60, %58, %62 : vector<8x128xi1>, vector<8x128xf32>
    %c17 = arith.constant 17 : index
    %64 = memref.load %arg0[%c17] : memref<63xf32, #tpu.memory_space<smem>>
    %65 = vector.broadcast %64 : f32 to vector<8x128xf32>
    %66 = arith.mulf %63, %65 : vector<8x128xf32>
    %67 = arith.addf %44, %66 : vector<8x128xf32>
    %c6 = arith.constant 6 : index
    %68 = memref.load %arg0[%c6] : memref<63xf32, #tpu.memory_space<smem>>
    %69 = vector.broadcast %68 : f32 to vector<8x128xf32>
    %70 = arith.mulf %19, %69 : vector<8x128xf32>
    %c7 = arith.constant 7 : index
    %71 = memref.load %arg0[%c7] : memref<63xf32, #tpu.memory_space<smem>>
    %72 = vector.broadcast %71 : f32 to vector<8x128xf32>
    %73 = arith.mulf %21, %72 : vector<8x128xf32>
    %74 = arith.addf %70, %73 : vector<8x128xf32>
    %c8 = arith.constant 8 : index
    %75 = memref.load %arg0[%c8] : memref<63xf32, #tpu.memory_space<smem>>
    %76 = vector.broadcast %75 : f32 to vector<8x128xf32>
    %77 = arith.mulf %22, %76 : vector<8x128xf32>
    %78 = arith.addf %74, %77 : vector<8x128xf32>
    %c14 = arith.constant 14 : index
    %79 = memref.load %arg0[%c14] : memref<63xf32, #tpu.memory_space<smem>>
    %80 = vector.broadcast %79 : f32 to vector<8x128xf32>
    %81 = arith.addf %78, %80 : vector<8x128xf32>
    %cst_15 = arith.constant 0.000000e+00 : f32
    %82 = vector.broadcast %cst_15 : f32 to vector<8x128xf32>
    %83 = arith.cmpf oge, %81, %82 : vector<8x128xf32>
    %cst_16 = arith.constant 1.000000e-01 : f32
    %84 = vector.broadcast %cst_16 : f32 to vector<8x128xf32>
    %85 = arith.mulf %84, %81 : vector<8x128xf32>
    %86 = arith.select %83, %81, %85 : vector<8x128xi1>, vector<8x128xf32>
    %c18 = arith.constant 18 : index
    %87 = memref.load %arg0[%c18] : memref<63xf32, #tpu.memory_space<smem>>
    %88 = vector.broadcast %87 : f32 to vector<8x128xf32>
    %89 = arith.mulf %86, %88 : vector<8x128xf32>
    %90 = arith.addf %67, %89 : vector<8x128xf32>
    %c9 = arith.constant 9 : index
    %91 = memref.load %arg0[%c9] : memref<63xf32, #tpu.memory_space<smem>>
    %92 = vector.broadcast %91 : f32 to vector<8x128xf32>
    %93 = arith.mulf %19, %92 : vector<8x128xf32>
    %c10 = arith.constant 10 : index
    %94 = memref.load %arg0[%c10] : memref<63xf32, #tpu.memory_space<smem>>
    %95 = vector.broadcast %94 : f32 to vector<8x128xf32>
    %96 = arith.mulf %21, %95 : vector<8x128xf32>
    %97 = arith.addf %93, %96 : vector<8x128xf32>
    %c11 = arith.constant 11 : index
    %98 = memref.load %arg0[%c11] : memref<63xf32, #tpu.memory_space<smem>>
    %99 = vector.broadcast %98 : f32 to vector<8x128xf32>
    %100 = arith.mulf %22, %99 : vector<8x128xf32>
    %101 = arith.addf %97, %100 : vector<8x128xf32>
    %c15 = arith.constant 15 : index
    %102 = memref.load %arg0[%c15] : memref<63xf32, #tpu.memory_space<smem>>
    %103 = vector.broadcast %102 : f32 to vector<8x128xf32>
    %104 = arith.addf %101, %103 : vector<8x128xf32>
    %cst_17 = arith.constant 0.000000e+00 : f32
    %105 = vector.broadcast %cst_17 : f32 to vector<8x128xf32>
    %106 = arith.cmpf oge, %104, %105 : vector<8x128xf32>
    %cst_18 = arith.constant 1.000000e-01 : f32
    %107 = vector.broadcast %cst_18 : f32 to vector<8x128xf32>
    %108 = arith.mulf %107, %104 : vector<8x128xf32>
    %109 = arith.select %106, %104, %108 : vector<8x128xi1>, vector<8x128xf32>
    %c19 = arith.constant 19 : index
    %110 = memref.load %arg0[%c19] : memref<63xf32, #tpu.memory_space<smem>>
    %111 = vector.broadcast %110 : f32 to vector<8x128xf32>
    %112 = arith.mulf %109, %111 : vector<8x128xf32>
    %113 = arith.addf %90, %112 : vector<8x128xf32>
    %c20 = arith.constant 20 : index
    %114 = memref.load %arg0[%c20] : memref<63xf32, #tpu.memory_space<smem>>
    %115 = vector.broadcast %114 : f32 to vector<8x128xf32>
    %116 = arith.addf %113, %115 : vector<8x128xf32>
    %117 = vector.extract_strided_slice %0 {offsets = [2, 0], sizes = [1, 128], strides = [1, 1]} : vector<8x128xf32> to vector<1x128xf32>
    %118 = vector.extract_strided_slice %0 {offsets = [5, 0], sizes = [1, 128], strides = [1, 1]} : vector<8x128xf32> to vector<1x128xf32>
    %119 = vector.broadcast %117 : vector<1x128xf32> to vector<8x128xf32>
    %120 = arith.subf %116, %119 : vector<8x128xf32>
    %cst_19 = arith.constant 9.99999974E-6 : f32
    %121 = vector.broadcast %cst_19 : f32 to vector<1x128xf32>
    %122 = arith.addf %118, %121 : vector<1x128xf32>
    %123 = math.rsqrt %122 : vector<1x128xf32>
    %124 = vector.broadcast %123 : vector<1x128xf32> to vector<8x128xf32>
    %125 = arith.mulf %120, %124 : vector<8x128xf32>
    %c0_20 = arith.constant 0 : index
    %c0_21 = arith.constant 0 : index
    %c0_22 = arith.constant 0 : index
    %126 = vector.load %arg5[%c0_20, %c0_21, %c0_22] : memref<3x8x128xf32, #tpu.memory_space<vmem>>, vector<1x8x128xf32>
    %127 = vector.shape_cast %126 : vector<1x8x128xf32> to vector<8x128xf32>
    %128 = vector.shape_cast %125 : vector<8x128xf32> to vector<1x8x128xf32>
    tpu.vector_store %arg5[%c0_20, %c0_21, %c0_22], %128 {strides = array<i32>} : memref<3x8x128xf32, #tpu.memory_space<vmem>>, vector<1x8x128xf32>,
    %c0_23 = arith.constant 0 : index
    %c0_24 = arith.constant 0 : index
    %c0_25 = arith.constant 0 : index
    %129 = vector.load %arg3[%c0_23, %c0_24, %c0_25] : memref<2x128x128xf32, #tpu.memory_space<vmem>>, vector<1x128x128xf32>
    %130 = vector.shape_cast %129 : vector<1x128x128xf32> to vector<128x128xf32>
    %cst_26 = arith.constant dense<0.000000e+00> : vector<8x128xf32>
    %131 = tpu.matmul %116, %130, %cst_26 {dimension_numbers = #tpu.dot_dimension_numbers<[1], [0], [0], [1], [0, 0, 1, 1], [], []>} : vector<8x128xf32>, vector<128x128xf32>, vector<8x128xf32> -> vector<8x128xf32>
    %132 = vector.extract_strided_slice %0 {offsets = [0, 0], sizes = [1, 128], strides = [1, 1]} : vector<8x128xf32> to vector<1x128xf32>
    %133 = vector.broadcast %132 : vector<1x128xf32> to vector<8x128xf32>
    %134 = arith.addf %131, %133 : vector<8x128xf32>
    %cst_27 = arith.constant dense<0.000000e+00> : vector<128xf32>
    %135 = vector.multi_reduction <add>, %134, %cst_27 [0] : vector<8x128xf32> to vector<128xf32>
    %136 = vector.shape_cast %135 : vector<128xf32> to vector<1x128xf32>
    %cst_28 = arith.constant 8.000000e+00 : f32
    %137 = vector.broadcast %cst_28 : f32 to vector<1x128xf32>
    %138 = arith.divf %136, %137 : vector<1x128xf32>
    %139 = vector.broadcast %138 : vector<1x128xf32> to vector<8x128xf32>
    %140 = arith.subf %134, %139 : vector<8x128xf32>
    %141 = arith.mulf %140, %140 : vector<8x128xf32>
    %cst_29 = arith.constant dense<0.000000e+00> : vector<128xf32>
    %142 = vector.multi_reduction <add>, %141, %cst_29 [0] : vector<8x128xf32> to vector<128xf32>
    %143 = vector.shape_cast %142 : vector<128xf32> to vector<1x128xf32>
    %cst_30 = arith.constant 8.000000e+00 : f32
    %144 = vector.broadcast %cst_30 : f32 to vector<1x128xf32>
    %145 = arith.divf %143, %144 : vector<1x128xf32>
    %146 = vector.broadcast %138 : vector<1x128xf32> to vector<8x128xf32>
    %147 = arith.subf %134, %146 : vector<8x128xf32>
    %cst_31 = arith.constant 9.99999974E-6 : f32
    %148 = vector.broadcast %cst_31 : f32 to vector<1x128xf32>
    %149 = arith.addf %145, %148 : vector<1x128xf32>
    %150 = math.rsqrt %149 : vector<1x128xf32>
    %151 = vector.broadcast %150 : vector<1x128xf32> to vector<8x128xf32>
    %152 = arith.mulf %147, %151 : vector<8x128xf32>
    %c1_32 = arith.constant 1 : index
    %c0_33 = arith.constant 0 : index
    %c0_34 = arith.constant 0 : index
    %153 = vector.load %arg2[%c1_32, %c0_33, %c0_34] : memref<3x8x128xf32, #tpu.memory_space<vmem>>, vector<1x8x128xf32>
    %154 = vector.shape_cast %153 : vector<1x8x128xf32> to vector<8x128xf32>
    %155 = arith.mulf %152, %154 : vector<8x128xf32>
    %c21 = arith.constant 21 : index
    %156 = memref.load %arg0[%c21] : memref<63xf32, #tpu.memory_space<smem>>
    %157 = vector.broadcast %156 : f32 to vector<8x128xf32>
    %158 = arith.mulf %152, %157 : vector<8x128xf32>
    %c22 = arith.constant 22 : index
    %159 = memref.load %arg0[%c22] : memref<63xf32, #tpu.memory_space<smem>>
    %160 = vector.broadcast %159 : f32 to vector<8x128xf32>
    %161 = arith.mulf %154, %160 : vector<8x128xf32>
    %162 = arith.addf %158, %161 : vector<8x128xf32>
    %c23 = arith.constant 23 : index
    %163 = memref.load %arg0[%c23] : memref<63xf32, #tpu.memory_space<smem>>
    %164 = vector.broadcast %163 : f32 to vector<8x128xf32>
    %165 = arith.mulf %155, %164 : vector<8x128xf32>
    %166 = arith.addf %162, %165 : vector<8x128xf32>
    %c33 = arith.constant 33 : index
    %167 = memref.load %arg0[%c33] : memref<63xf32, #tpu.memory_space<smem>>
    %168 = vector.broadcast %167 : f32 to vector<8x128xf32>
    %169 = arith.addf %166, %168 : vector<8x128xf32>
    %cst_35 = arith.constant 0.000000e+00 : f32
    %170 = vector.broadcast %cst_35 : f32 to vector<8x128xf32>
    %171 = arith.cmpf oge, %169, %170 : vector<8x128xf32>
    %cst_36 = arith.constant 1.000000e-01 : f32
    %172 = vector.broadcast %cst_36 : f32 to vector<8x128xf32>
    %173 = arith.mulf %172, %169 : vector<8x128xf32>
    %174 = arith.select %171, %169, %173 : vector<8x128xi1>, vector<8x128xf32>
    %c37 = arith.constant 37 : index
    %175 = memref.load %arg0[%c37] : memref<63xf32, #tpu.memory_space<smem>>
    %176 = vector.broadcast %175 : f32 to vector<8x128xf32>
    %177 = arith.mulf %174, %176 : vector<8x128xf32>
    %c24 = arith.constant 24 : index
    %178 = memref.load %arg0[%c24] : memref<63xf32, #tpu.memory_space<smem>>
    %179 = vector.broadcast %178 : f32 to vector<8x128xf32>
    %180 = arith.mulf %152, %179 : vector<8x128xf32>
    %c25 = arith.constant 25 : index
    %181 = memref.load %arg0[%c25] : memref<63xf32, #tpu.memory_space<smem>>
    %182 = vector.broadcast %181 : f32 to vector<8x128xf32>
    %183 = arith.mulf %154, %182 : vector<8x128xf32>
    %184 = arith.addf %180, %183 : vector<8x128xf32>
    %c26 = arith.constant 26 : index
    %185 = memref.load %arg0[%c26] : memref<63xf32, #tpu.memory_space<smem>>
    %186 = vector.broadcast %185 : f32 to vector<8x128xf32>
    %187 = arith.mulf %155, %186 : vector<8x128xf32>
    %188 = arith.addf %184, %187 : vector<8x128xf32>
    %c34 = arith.constant 34 : index
    %189 = memref.load %arg0[%c34] : memref<63xf32, #tpu.memory_space<smem>>
    %190 = vector.broadcast %189 : f32 to vector<8x128xf32>
    %191 = arith.addf %188, %190 : vector<8x128xf32>
    %cst_37 = arith.constant 0.000000e+00 : f32
    %192 = vector.broadcast %cst_37 : f32 to vector<8x128xf32>
    %193 = arith.cmpf oge, %191, %192 : vector<8x128xf32>
    %cst_38 = arith.constant 1.000000e-01 : f32
    %194 = vector.broadcast %cst_38 : f32 to vector<8x128xf32>
    %195 = arith.mulf %194, %191 : vector<8x128xf32>
    %196 = arith.select %193, %191, %195 : vector<8x128xi1>, vector<8x128xf32>
    %c38 = arith.constant 38 : index
    %197 = memref.load %arg0[%c38] : memref<63xf32, #tpu.memory_space<smem>>
    %198 = vector.broadcast %197 : f32 to vector<8x128xf32>
    %199 = arith.mulf %196, %198 : vector<8x128xf32>
    %200 = arith.addf %177, %199 : vector<8x128xf32>
    %c27 = arith.constant 27 : index
    %201 = memref.load %arg0[%c27] : memref<63xf32, #tpu.memory_space<smem>>
    %202 = vector.broadcast %201 : f32 to vector<8x128xf32>
    %203 = arith.mulf %152, %202 : vector<8x128xf32>
    %c28 = arith.constant 28 : index
    %204 = memref.load %arg0[%c28] : memref<63xf32, #tpu.memory_space<smem>>
    %205 = vector.broadcast %204 : f32 to vector<8x128xf32>
    %206 = arith.mulf %154, %205 : vector<8x128xf32>
    %207 = arith.addf %203, %206 : vector<8x128xf32>
    %c29 = arith.constant 29 : index
    %208 = memref.load %arg0[%c29] : memref<63xf32, #tpu.memory_space<smem>>
    %209 = vector.broadcast %208 : f32 to vector<8x128xf32>
    %210 = arith.mulf %155, %209 : vector<8x128xf32>
    %211 = arith.addf %207, %210 : vector<8x128xf32>
    %c35 = arith.constant 35 : index
    %212 = memref.load %arg0[%c35] : memref<63xf32, #tpu.memory_space<smem>>
    %213 = vector.broadcast %212 : f32 to vector<8x128xf32>
    %214 = arith.addf %211, %213 : vector<8x128xf32>
    %cst_39 = arith.constant 0.000000e+00 : f32
    %215 = vector.broadcast %cst_39 : f32 to vector<8x128xf32>
    %216 = arith.cmpf oge, %214, %215 : vector<8x128xf32>
    %cst_40 = arith.constant 1.000000e-01 : f32
    %217 = vector.broadcast %cst_40 : f32 to vector<8x128xf32>
    %218 = arith.mulf %217, %214 : vector<8x128xf32>
    %219 = arith.select %216, %214, %218 : vector<8x128xi1>, vector<8x128xf32>
    %c39 = arith.constant 39 : index
    %220 = memref.load %arg0[%c39] : memref<63xf32, #tpu.memory_space<smem>>
    %221 = vector.broadcast %220 : f32 to vector<8x128xf32>
    %222 = arith.mulf %219, %221 : vector<8x128xf32>
    %223 = arith.addf %200, %222 : vector<8x128xf32>
    %c30 = arith.constant 30 : index
    %224 = memref.load %arg0[%c30] : memref<63xf32, #tpu.memory_space<smem>>
    %225 = vector.broadcast %224 : f32 to vector<8x128xf32>
    %226 = arith.mulf %152, %225 : vector<8x128xf32>
    %c31 = arith.constant 31 : index
    %227 = memref.load %arg0[%c31] : memref<63xf32, #tpu.memory_space<smem>>
    %228 = vector.broadcast %227 : f32 to vector<8x128xf32>
    %229 = arith.mulf %154, %228 : vector<8x128xf32>
    %230 = arith.addf %226, %229 : vector<8x128xf32>
    %c32 = arith.constant 32 : index
    %231 = memref.load %arg0[%c32] : memref<63xf32, #tpu.memory_space<smem>>
    %232 = vector.broadcast %231 : f32 to vector<8x128xf32>
    %233 = arith.mulf %155, %232 : vector<8x128xf32>
    %234 = arith.addf %230, %233 : vector<8x128xf32>
    %c36 = arith.constant 36 : index
    %235 = memref.load %arg0[%c36] : memref<63xf32, #tpu.memory_space<smem>>
    %236 = vector.broadcast %235 : f32 to vector<8x128xf32>
    %237 = arith.addf %234, %236 : vector<8x128xf32>
    %cst_41 = arith.constant 0.000000e+00 : f32
    %238 = vector.broadcast %cst_41 : f32 to vector<8x128xf32>
    %239 = arith.cmpf oge, %237, %238 : vector<8x128xf32>
    %cst_42 = arith.constant 1.000000e-01 : f32
    %240 = vector.broadcast %cst_42 : f32 to vector<8x128xf32>
    %241 = arith.mulf %240, %237 : vector<8x128xf32>
    %242 = arith.select %239, %237, %241 : vector<8x128xi1>, vector<8x128xf32>
    %c40 = arith.constant 40 : index
    %243 = memref.load %arg0[%c40] : memref<63xf32, #tpu.memory_space<smem>>
    %244 = vector.broadcast %243 : f32 to vector<8x128xf32>
    %245 = arith.mulf %242, %244 : vector<8x128xf32>
    %246 = arith.addf %223, %245 : vector<8x128xf32>
    %c41 = arith.constant 41 : index
    %247 = memref.load %arg0[%c41] : memref<63xf32, #tpu.memory_space<smem>>
    %248 = vector.broadcast %247 : f32 to vector<8x128xf32>
    %249 = arith.addf %246, %248 : vector<8x128xf32>
    %250 = vector.extract_strided_slice %0 {offsets = [3, 0], sizes = [1, 128], strides = [1, 1]} : vector<8x128xf32> to vector<1x128xf32>
    %251 = vector.extract_strided_slice %0 {offsets = [6, 0], sizes = [1, 128], strides = [1, 1]} : vector<8x128xf32> to vector<1x128xf32>
    %252 = vector.broadcast %250 : vector<1x128xf32> to vector<8x128xf32>
    %253 = arith.subf %249, %252 : vector<8x128xf32>
    %cst_43 = arith.constant 9.99999974E-6 : f32
    %254 = vector.broadcast %cst_43 : f32 to vector<1x128xf32>
    %255 = arith.addf %251, %254 : vector<1x128xf32>
    %256 = math.rsqrt %255 : vector<1x128xf32>
    %257 = vector.broadcast %256 : vector<1x128xf32> to vector<8x128xf32>
    %258 = arith.mulf %253, %257 : vector<8x128xf32>
    %c1_44 = arith.constant 1 : index
    %c0_45 = arith.constant 0 : index
    %c0_46 = arith.constant 0 : index
    %259 = vector.load %arg5[%c1_44, %c0_45, %c0_46] : memref<3x8x128xf32, #tpu.memory_space<vmem>>, vector<1x8x128xf32>
    %260 = vector.shape_cast %259 : vector<1x8x128xf32> to vector<8x128xf32>
    %261 = vector.shape_cast %258 : vector<8x128xf32> to vector<1x8x128xf32>
    tpu.vector_store %arg5[%c1_44, %c0_45, %c0_46], %261 {strides = array<i32>} : memref<3x8x128xf32, #tpu.memory_space<vmem>>, vector<1x8x128xf32>,
    %c1_47 = arith.constant 1 : index
    %c0_48 = arith.constant 0 : index
    %c0_49 = arith.constant 0 : index
    %262 = vector.load %arg3[%c1_47, %c0_48, %c0_49] : memref<2x128x128xf32, #tpu.memory_space<vmem>>, vector<1x128x128xf32>
    %263 = vector.shape_cast %262 : vector<1x128x128xf32> to vector<128x128xf32>
    %cst_50 = arith.constant dense<0.000000e+00> : vector<8x128xf32>
    %264 = tpu.matmul %249, %263, %cst_50 {dimension_numbers = #tpu.dot_dimension_numbers<[1], [0], [0], [1], [0, 0, 1, 1], [], []>} : vector<8x128xf32>, vector<128x128xf32>, vector<8x128xf32> -> vector<8x128xf32>
    %265 = vector.extract_strided_slice %0 {offsets = [1, 0], sizes = [1, 128], strides = [1, 1]} : vector<8x128xf32> to vector<1x128xf32>
    %266 = vector.broadcast %265 : vector<1x128xf32> to vector<8x128xf32>
    %267 = arith.addf %264, %266 : vector<8x128xf32>
    %cst_51 = arith.constant dense<0.000000e+00> : vector<128xf32>
    %268 = vector.multi_reduction <add>, %267, %cst_51 [0] : vector<8x128xf32> to vector<128xf32>
    %269 = vector.shape_cast %268 : vector<128xf32> to vector<1x128xf32>
    %cst_52 = arith.constant 8.000000e+00 : f32
    %270 = vector.broadcast %cst_52 : f32 to vector<1x128xf32>
    %271 = arith.divf %269, %270 : vector<1x128xf32>
    %272 = vector.broadcast %271 : vector<1x128xf32> to vector<8x128xf32>
    %273 = arith.subf %267, %272 : vector<8x128xf32>
    %274 = arith.mulf %273, %273 : vector<8x128xf32>
    %cst_53 = arith.constant dense<0.000000e+00> : vector<128xf32>
    %275 = vector.multi_reduction <add>, %274, %cst_53 [0] : vector<8x128xf32> to vector<128xf32>
    %276 = vector.shape_cast %275 : vector<128xf32> to vector<1x128xf32>
    %cst_54 = arith.constant 8.000000e+00 : f32
    %277 = vector.broadcast %cst_54 : f32 to vector<1x128xf32>
    %278 = arith.divf %276, %277 : vector<1x128xf32>
    %279 = vector.broadcast %271 : vector<1x128xf32> to vector<8x128xf32>
    %280 = arith.subf %267, %279 : vector<8x128xf32>
    %cst_55 = arith.constant 9.99999974E-6 : f32
    %281 = vector.broadcast %cst_55 : f32 to vector<1x128xf32>
    %282 = arith.addf %278, %281 : vector<1x128xf32>
    %283 = math.rsqrt %282 : vector<1x128xf32>
    %284 = vector.broadcast %283 : vector<1x128xf32> to vector<8x128xf32>
    %285 = arith.mulf %280, %284 : vector<8x128xf32>
    %c2_56 = arith.constant 2 : index
    %c0_57 = arith.constant 0 : index
    %c0_58 = arith.constant 0 : index
    %286 = vector.load %arg2[%c2_56, %c0_57, %c0_58] : memref<3x8x128xf32, #tpu.memory_space<vmem>>, vector<1x8x128xf32>
    %287 = vector.shape_cast %286 : vector<1x8x128xf32> to vector<8x128xf32>
    %288 = arith.mulf %285, %287 : vector<8x128xf32>
    %c42 = arith.constant 42 : index
    %289 = memref.load %arg0[%c42] : memref<63xf32, #tpu.memory_space<smem>>
    %290 = vector.broadcast %289 : f32 to vector<8x128xf32>
    %291 = arith.mulf %285, %290 : vector<8x128xf32>
    %c43 = arith.constant 43 : index
    %292 = memref.load %arg0[%c43] : memref<63xf32, #tpu.memory_space<smem>>
    %293 = vector.broadcast %292 : f32 to vector<8x128xf32>
    %294 = arith.mulf %287, %293 : vector<8x128xf32>
    %295 = arith.addf %291, %294 : vector<8x128xf32>
    %c44 = arith.constant 44 : index
    %296 = memref.load %arg0[%c44] : memref<63xf32, #tpu.memory_space<smem>>
    %297 = vector.broadcast %296 : f32 to vector<8x128xf32>
    %298 = arith.mulf %288, %297 : vector<8x128xf32>
    %299 = arith.addf %295, %298 : vector<8x128xf32>
    %c54 = arith.constant 54 : index
    %300 = memref.load %arg0[%c54] : memref<63xf32, #tpu.memory_space<smem>>
    %301 = vector.broadcast %300 : f32 to vector<8x128xf32>
    %302 = arith.addf %299, %301 : vector<8x128xf32>
    %cst_59 = arith.constant 0.000000e+00 : f32
    %303 = vector.broadcast %cst_59 : f32 to vector<8x128xf32>
    %304 = arith.cmpf oge, %302, %303 : vector<8x128xf32>
    %cst_60 = arith.constant 1.000000e-01 : f32
    %305 = vector.broadcast %cst_60 : f32 to vector<8x128xf32>
    %306 = arith.mulf %305, %302 : vector<8x128xf32>
    %307 = arith.select %304, %302, %306 : vector<8x128xi1>, vector<8x128xf32>
    %c58 = arith.constant 58 : index
    %308 = memref.load %arg0[%c58] : memref<63xf32, #tpu.memory_space<smem>>
    %309 = vector.broadcast %308 : f32 to vector<8x128xf32>
    %310 = arith.mulf %307, %309 : vector<8x128xf32>
    %c45 = arith.constant 45 : index
    %311 = memref.load %arg0[%c45] : memref<63xf32, #tpu.memory_space<smem>>
    %312 = vector.broadcast %311 : f32 to vector<8x128xf32>
    %313 = arith.mulf %285, %312 : vector<8x128xf32>
    %c46 = arith.constant 46 : index
    %314 = memref.load %arg0[%c46] : memref<63xf32, #tpu.memory_space<smem>>
    %315 = vector.broadcast %314 : f32 to vector<8x128xf32>
    %316 = arith.mulf %287, %315 : vector<8x128xf32>
    %317 = arith.addf %313, %316 : vector<8x128xf32>
    %c47 = arith.constant 47 : index
    %318 = memref.load %arg0[%c47] : memref<63xf32, #tpu.memory_space<smem>>
    %319 = vector.broadcast %318 : f32 to vector<8x128xf32>
    %320 = arith.mulf %288, %319 : vector<8x128xf32>
    %321 = arith.addf %317, %320 : vector<8x128xf32>
    %c55 = arith.constant 55 : index
    %322 = memref.load %arg0[%c55] : memref<63xf32, #tpu.memory_space<smem>>
    %323 = vector.broadcast %322 : f32 to vector<8x128xf32>
    %324 = arith.addf %321, %323 : vector<8x128xf32>
    %cst_61 = arith.constant 0.000000e+00 : f32
    %325 = vector.broadcast %cst_61 : f32 to vector<8x128xf32>
    %326 = arith.cmpf oge, %324, %325 : vector<8x128xf32>
    %cst_62 = arith.constant 1.000000e-01 : f32
    %327 = vector.broadcast %cst_62 : f32 to vector<8x128xf32>
    %328 = arith.mulf %327, %324 : vector<8x128xf32>
    %329 = arith.select %326, %324, %328 : vector<8x128xi1>, vector<8x128xf32>
    %c59 = arith.constant 59 : index
    %330 = memref.load %arg0[%c59] : memref<63xf32, #tpu.memory_space<smem>>
    %331 = vector.broadcast %330 : f32 to vector<8x128xf32>
    %332 = arith.mulf %329, %331 : vector<8x128xf32>
    %333 = arith.addf %310, %332 : vector<8x128xf32>
    %c48 = arith.constant 48 : index
    %334 = memref.load %arg0[%c48] : memref<63xf32, #tpu.memory_space<smem>>
    %335 = vector.broadcast %334 : f32 to vector<8x128xf32>
    %336 = arith.mulf %285, %335 : vector<8x128xf32>
    %c49 = arith.constant 49 : index
    %337 = memref.load %arg0[%c49] : memref<63xf32, #tpu.memory_space<smem>>
    %338 = vector.broadcast %337 : f32 to vector<8x128xf32>
    %339 = arith.mulf %287, %338 : vector<8x128xf32>
    %340 = arith.addf %336, %339 : vector<8x128xf32>
    %c50 = arith.constant 50 : index
    %341 = memref.load %arg0[%c50] : memref<63xf32, #tpu.memory_space<smem>>
    %342 = vector.broadcast %341 : f32 to vector<8x128xf32>
    %343 = arith.mulf %288, %342 : vector<8x128xf32>
    %344 = arith.addf %340, %343 : vector<8x128xf32>
    %c56 = arith.constant 56 : index
    %345 = memref.load %arg0[%c56] : memref<63xf32, #tpu.memory_space<smem>>
    %346 = vector.broadcast %345 : f32 to vector<8x128xf32>
    %347 = arith.addf %344, %346 : vector<8x128xf32>
    %cst_63 = arith.constant 0.000000e+00 : f32
    %348 = vector.broadcast %cst_63 : f32 to vector<8x128xf32>
    %349 = arith.cmpf oge, %347, %348 : vector<8x128xf32>
    %cst_64 = arith.constant 1.000000e-01 : f32
    %350 = vector.broadcast %cst_64 : f32 to vector<8x128xf32>
    %351 = arith.mulf %350, %347 : vector<8x128xf32>
    %352 = arith.select %349, %347, %351 : vector<8x128xi1>, vector<8x128xf32>
    %c60 = arith.constant 60 : index
    %353 = memref.load %arg0[%c60] : memref<63xf32, #tpu.memory_space<smem>>
    %354 = vector.broadcast %353 : f32 to vector<8x128xf32>
    %355 = arith.mulf %352, %354 : vector<8x128xf32>
    %356 = arith.addf %333, %355 : vector<8x128xf32>
    %c51 = arith.constant 51 : index
    %357 = memref.load %arg0[%c51] : memref<63xf32, #tpu.memory_space<smem>>
    %358 = vector.broadcast %357 : f32 to vector<8x128xf32>
    %359 = arith.mulf %285, %358 : vector<8x128xf32>
    %c52 = arith.constant 52 : index
    %360 = memref.load %arg0[%c52] : memref<63xf32, #tpu.memory_space<smem>>
    %361 = vector.broadcast %360 : f32 to vector<8x128xf32>
    %362 = arith.mulf %287, %361 : vector<8x128xf32>
    %363 = arith.addf %359, %362 : vector<8x128xf32>
    %c53 = arith.constant 53 : index
    %364 = memref.load %arg0[%c53] : memref<63xf32, #tpu.memory_space<smem>>
    %365 = vector.broadcast %364 : f32 to vector<8x128xf32>
    %366 = arith.mulf %288, %365 : vector<8x128xf32>
    %367 = arith.addf %363, %366 : vector<8x128xf32>
    %c57 = arith.constant 57 : index
    %368 = memref.load %arg0[%c57] : memref<63xf32, #tpu.memory_space<smem>>
    %369 = vector.broadcast %368 : f32 to vector<8x128xf32>
    %370 = arith.addf %367, %369 : vector<8x128xf32>
    %cst_65 = arith.constant 0.000000e+00 : f32
    %371 = vector.broadcast %cst_65 : f32 to vector<8x128xf32>
    %372 = arith.cmpf oge, %370, %371 : vector<8x128xf32>
    %cst_66 = arith.constant 1.000000e-01 : f32
    %373 = vector.broadcast %cst_66 : f32 to vector<8x128xf32>
    %374 = arith.mulf %373, %370 : vector<8x128xf32>
    %375 = arith.select %372, %370, %374 : vector<8x128xi1>, vector<8x128xf32>
    %c61 = arith.constant 61 : index
    %376 = memref.load %arg0[%c61] : memref<63xf32, #tpu.memory_space<smem>>
    %377 = vector.broadcast %376 : f32 to vector<8x128xf32>
    %378 = arith.mulf %375, %377 : vector<8x128xf32>
    %379 = arith.addf %356, %378 : vector<8x128xf32>
    %c62 = arith.constant 62 : index
    %380 = memref.load %arg0[%c62] : memref<63xf32, #tpu.memory_space<smem>>
    %381 = vector.broadcast %380 : f32 to vector<8x128xf32>
    %382 = arith.addf %379, %381 : vector<8x128xf32>
    %383 = vector.extract_strided_slice %0 {offsets = [4, 0], sizes = [1, 128], strides = [1, 1]} : vector<8x128xf32> to vector<1x128xf32>
    %384 = vector.extract_strided_slice %0 {offsets = [7, 0], sizes = [1, 128], strides = [1, 1]} : vector<8x128xf32> to vector<1x128xf32>
    %385 = vector.broadcast %383 : vector<1x128xf32> to vector<8x128xf32>
    %386 = arith.subf %382, %385 : vector<8x128xf32>
    %cst_67 = arith.constant 9.99999974E-6 : f32
    %387 = vector.broadcast %cst_67 : f32 to vector<1x128xf32>
    %388 = arith.addf %384, %387 : vector<1x128xf32>
    %389 = math.rsqrt %388 : vector<1x128xf32>
    %390 = vector.broadcast %389 : vector<1x128xf32> to vector<8x128xf32>
    %391 = arith.mulf %386, %390 : vector<8x128xf32>
    %c2_68 = arith.constant 2 : index
    %c0_69 = arith.constant 0 : index
    %c0_70 = arith.constant 0 : index
    %392 = vector.load %arg5[%c2_68, %c0_69, %c0_70] : memref<3x8x128xf32, #tpu.memory_space<vmem>>, vector<1x8x128xf32>
    %393 = vector.shape_cast %392 : vector<1x8x128xf32> to vector<8x128xf32>
    %394 = vector.shape_cast %391 : vector<8x128xf32> to vector<1x8x128xf32>
    tpu.vector_store %arg5[%c2_68, %c0_69, %c0_70], %394 {strides = array<i32>} : memref<3x8x128xf32, #tpu.memory_space<vmem>>, vector<1x8x128xf32>,
    return
  }
}

</mosaic_0001>

<llo_original>
// kernel: tpu_custom_call.1
$region0: #{tpu_custom_call.1}
  #allocation0 [shape = 'u32[]', space=smem, size = 0x4, offset = 0x4, fixed_abs, tag = 'smem constant byte address 0x4 - core index']
  #allocation1 [shape = 'u32[144,128]{1,0:T(1,128)}', space=vmem, size = 0x12000, scoped, tag = 'internal scratch']
  %s0 = inlined_call_operand.hbm [shape: f32[63], index: 0, kind: input, shape index: {}]
  %s1 = inlined_call_operand.hbm [shape: f32[8,128], index: 1, kind: input, shape index: {}]
  %s2 = inlined_call_operand.hbm [shape: f32[3,8,128], index: 2, kind: input, shape index: {}]
  %s3 = inlined_call_operand.hbm [shape: f32[2,128,128], index: 3, kind: input, shape index: {}]
  %s4 = inlined_call_operand.vmem [shape: f32[8,128], index: 4, kind: input, shape index: {}]
  %s5 = inlined_call_operand.hbm [shape: f32[3,8,128], index: 5, kind: output, shape index: {}]
  %s6 = sld [smem:[#allocation0]]
  $region46: #{tpu_custom_call.1} parent=0
    _
  %s8 = ssub.s32 1, %s6
  %s9 = scalar_select 0, %s8, %s6
  $region1: #{tpu_custom_call.1} parent=0
    #allocation2 [shape = 'u8[512]{0}', space=smem, size = 0x200, scoped, tag = 'input window, operand 0, single buffered']
    #allocation3 [shape = 's32[1]{0}', space=sflag, size = 0x4, scoped, tag = 'scoped memory for tpu_custom_call.1']
    #allocation4 [shape = 's32[1]{0}', space=sflag, size = 0x4, scoped, tag = 'scoped memory for tpu_custom_call.1']
    #allocation5 [shape = 's32[1]{0}', space=sflag, size = 0x4, scoped, tag = 'scoped memory for tpu_custom_call.1']
    #allocation6 [shape = 'u8[4096]{0}', space=vmem, size = 0x1000, scoped, tag = 'input window, operand 1, single buffered']
    #allocation7 [shape = 'u8[12288]{0}', space=vmem, size = 0x3000, scoped, tag = 'input window, operand 2, single buffered']
    #allocation8 [shape = 's32[1]{0}', space=sflag, size = 0x4, scoped, tag = 'scoped memory for tpu_custom_call.1']
    #allocation9 [shape = 'u8[131072]{0}', space=vmem, size = 0x20000, scoped, tag = 'input window, operand 3, single buffered']
    #allocation10 [shape = 'u8[12288]{0}', space=vmem, size = 0x3000, scoped, tag = 'output window, operand 0, single buffered']
    %10 = vsyncpa [#allocation5], 0
    %11 = vsyncpa [#allocation3], 0
    %12 = vsyncpa [#allocation8], 0
    %13 = vsyncpa [#allocation4], 0
    // Predicated region
    $region2: #{tpu_custom_call.1} parent=1 // pred_check
      _
    $region3: #{tpu_custom_call.1} parent=1 // pred_check_branch
      %15 = sbr.rel (0) target = $region5
    $region4: #{tpu_custom_call.1} parent=1 // pred_region
      %s17 = ssub.s32 16, 16
      %18 = vsyncadd [#allocation5], %s17
      %21 = dma.hbm_to_smem %s0, 16, [#allocation2], [#allocation5]
    $region5: #{tpu_custom_call.1} parent=1 // pred_fallthru
      _
    // Predicated region
    $region6: #{tpu_custom_call.1} parent=1 // pred_check
      _
    $region7: #{tpu_custom_call.1} parent=1 // pred_check_branch
      %23 = sbr.rel (0) target = $region9
    $region8: #{tpu_custom_call.1} parent=1 // pred_region
      %s25 = ssub.s32 128, 128
      %26 = vsyncadd [#allocation3], %s25
      %s28 = sshll.u32 [#allocation6], 4
      %s29 = int_to_ptr.vmem [resolvable:$true] %s28
      %31 = dma.hbm_to_vmem [thread:$0]  %s1, 128, %s29, [#allocation3]
    $region9: #{tpu_custom_call.1} parent=1 // pred_fallthru
      _
    // Predicated region
    $region10: #{tpu_custom_call.1} parent=1 // pred_check
      _
    $region11: #{tpu_custom_call.1} parent=1 // pred_check_branch
      %33 = sbr.rel (0) target = $region13
    $region12: #{tpu_custom_call.1} parent=1 // pred_region
      %s35 = ssub.s32 384, 384
      %36 = vsyncadd [#allocation8], %s35
      %s37 = sshll.u32 [#allocation7], 4
      %s38 = int_to_ptr.vmem [resolvable:$true] %s37
      %43 = dma.hbm_to_vmem [thread:$0]  %s2, 384, %s38, [#allocation8], 128, 128, 8
    $region13: #{tpu_custom_call.1} parent=1 // pred_fallthru
      _
    // Predicated region
    $region14: #{tpu_custom_call.1} parent=1 // pred_check
      _
    $region15: #{tpu_custom_call.1} parent=1 // pred_check_branch
      %45 = sbr.rel (0) target = $region17
    $region16: #{tpu_custom_call.1} parent=1 // pred_region
      %s47 = ssub.s32 4096, 4096
      %48 = vsyncadd [#allocation8], %s47
      %s49 = sshll.u32 [#allocation9], 4
      %s50 = int_to_ptr.vmem [resolvable:$true] %s49
      %55 = dma.hbm_to_vmem [thread:$0]  %s3, 4096, %s50, [#allocation8], 128, 128, 8
    $region17: #{tpu_custom_call.1} parent=1 // pred_fallthru
      _
    // Predicated region
    $region18: #{tpu_custom_call.1} parent=1 // pred_check
      _
    $region19: #{tpu_custom_call.1} parent=1 // pred_check_branch
      %57 = sbr.rel (0) target = $region21
    $region20: #{tpu_custom_call.1} parent=1 // pred_region
      _
    $region21: #{tpu_custom_call.1} parent=1 // pred_fallthru
      _
    // Predicated region
    $region22: #{tpu_custom_call.1} parent=1 // pred_check
      _
    $region23: #{tpu_custom_call.1} parent=1 // pred_check_branch
      %59 = sbr.rel (0) target = $region25
    $region24: #{tpu_custom_call.1} parent=1 // pred_region
      %60 = dma.done [#allocation5], 16
    $region25: #{tpu_custom_call.1} parent=1 // pred_fallthru
      _
    // Predicated region
    $region26: #{tpu_custom_call.1} parent=1 // pred_check
      _
    $region27: #{tpu_custom_call.1} parent=1 // pred_check_branch
      %62 = sbr.rel (0) target = $region29
    $region28: #{tpu_custom_call.1} parent=1 // pred_region
      %63 = dma.done [#allocation3], 128
    $region29: #{tpu_custom_call.1} parent=1 // pred_fallthru
      _
    // Predicated region
    $region30: #{tpu_custom_call.1} parent=1 // pred_check
      _
    $region31: #{tpu_custom_call.1} parent=1 // pred_check_branch
      %65 = sbr.rel (0) target = $region33
    $region32: #{tpu_custom_call.1} parent=1 // pred_region
      %66 = dma.done [#allocation8], 384
    $region33: #{tpu_custom_call.1} parent=1 // pred_fallthru
      _
    // Predicated region
    $region34: #{tpu_custom_call.1} parent=1 // pred_check
      _
    $region35: #{tpu_custom_call.1} parent=1 // pred_check_branch
      %68 = sbr.rel (0) target = $region37
    $region36: #{tpu_custom_call.1} parent=1 // pred_region
      %69 = dma.done [#allocation8], 4096
    $region37: #{tpu_custom_call.1} parent=1 // pred_fallthru
      _
    %70 = sfence
    %v71 = vld [vmem:[%s4] sm:$0xff]
    %v72 = vld [vmem:[#allocation6] sm:$0xff]
    %v73 = vrot.slane %v72, 4
    %v74 = vadd.f32 %v72, %v73
    %v75 = vrot.slane %v74, 2
    %v76 = vadd.f32 %v74, %v75
    %v77 = vrot.slane %v76, 1
    %v78 = vadd.f32 %v76, %v77
    %v79 = vrcp.pop 8.0
    %v80 = vmul.f32 %v78, %v79
    %v81 = vsub.f32 %v72, %v80
    %v82 = vmul.f32 %v81, %v81
    %v83 = vrot.slane %v82, 4
    %v84 = vadd.f32 %v82, %v83
    %v85 = vrot.slane %v84, 2
    %v86 = vadd.f32 %v84, %v85
    %v87 = vrot.slane %v86, 1
    %v88 = vadd.f32 %v86, %v87
    %v89 = vmul.f32 %v88, %v79
    %v90 = vadd.f32 %v89, 1e-05
    %v91 = vrsqrt.pop %v90
    %v92 = vmul.f32 %v81, %v91
    %v93 = vld [vmem:[#allocation7] sm:$0xff]
    %v94 = vmul.f32 %v92, %v93
    %s95 = sld [smem:[#allocation2]]
    %v96 = vstv %s95
    %v97 = vmul.f32 %v92, %v96
    %s98 = sld [smem:[#allocation2 + $0x1]]
    %v99 = vstv %s98
    %v100 = vmul.f32 %v93, %v99
    %v101 = vadd.f32 %v97, %v100
    %s102 = sld [smem:[#allocation2 + $0x2]]
    %v103 = vstv %s102
    %v104 = vmul.f32 %v94, %v103
    %v105 = vadd.f32 %v101, %v104
    %s106 = sld [smem:[#allocation2 + $0xc]]
    %v107 = vstv %s106
    %v108 = vadd.f32 %v105, %v107
    %vm109 = vcmp.ge.f32.partialorder %v108, 0.0
    %v110 = vmul.f32 %v108, 0.1
    %v111 = vsel %vm109, %v108, %v110
    %s112 = sld [smem:[#allocation2 + $0x10]]
    %v113 = vstv %s112
    %v114 = vmul.f32 %v111, %v113
    %s115 = sld [smem:[#allocation2 + $0x3]]
    %v116 = vstv %s115
    %v117 = vmul.f32 %v92, %v116
    %s118 = sld [smem:[#allocation2 + $0x4]]
    %v119 = vstv %s118
    %v120 = vmul.f32 %v93, %v119
    %v121 = vadd.f32 %v117, %v120
    %s122 = sld [smem:[#allocation2 + $0x5]]
    %v123 = vstv %s122
    %v124 = vmul.f32 %v94, %v123
    %v125 = vadd.f32 %v121, %v124
    %s126 = sld [smem:[#allocation2 + $0xd]]
    %v127 = vstv %s126
    %v128 = vadd.f32 %v125, %v127
    %vm129 = vcmp.ge.f32.partialorder %v128, 0.0
    %v130 = vmul.f32 %v128, 0.1
    %v131 = vsel %vm129, %v128, %v130
    %s132 = sld [smem:[#allocation2 + $0x11]]
    %v133 = vstv %s132
    %v134 = vmul.f32 %v131, %v133
    %v135 = vadd.f32 %v114, %v134
    %s136 = sld [smem:[#allocation2 + $0x6]]
    %v137 = vstv %s136
    %v138 = vmul.f32 %v92, %v137
    %s139 = sld [smem:[#allocation2 + $0x7]]
    %v140 = vstv %s139
    %v141 = vmul.f32 %v93, %v140
    %v142 = vadd.f32 %v138, %v141
    %s143 = sld [smem:[#allocation2 + $0x8]]
    %v144 = vstv %s143
    %v145 = vmul.f32 %v94, %v144
    %v146 = vadd.f32 %v142, %v145
    %s147 = sld [smem:[#allocation2 + $0xe]]
    %v148 = vstv %s147
    %v149 = vadd.f32 %v146, %v148
    %vm150 = vcmp.ge.f32.partialorder %v149, 0.0
    %v151 = vmul.f32 %v149, 0.1
    %v152 = vsel %vm150, %v149, %v151
    %s153 = sld [smem:[#allocation2 + $0x12]]
    %v154 = vstv %s153
    %v155 = vmul.f32 %v152, %v154
    %v156 = vadd.f32 %v135, %v155
    %s157 = sld [smem:[#allocation2 + $0x9]]
    %v158 = vstv %s157
    %v159 = vmul.f32 %v92, %v158
    %s160 = sld [smem:[#allocation2 + $0xa]]
    %v161 = vstv %s160
    %v162 = vmul.f32 %v93, %v161
    %v163 = vadd.f32 %v159, %v162
    %s164 = sld [smem:[#allocation2 + $0xb]]
    %v165 = vstv %s164
    %v166 = vmul.f32 %v94, %v165
    %v167 = vadd.f32 %v163, %v166
    %s168 = sld [smem:[#allocation2 + $0xf]]
    %v169 = vstv %s168
    %v170 = vadd.f32 %v167, %v169
    %vm171 = vcmp.ge.f32.partialorder %v170, 0.0
    %v172 = vmul.f32 %v170, 0.1
    %v173 = vsel %vm171, %v170, %v172
    %s174 = sld [smem:[#allocation2 + $0x13]]
    %v175 = vstv %s174
    %v176 = vmul.f32 %v173, %v175
    %v177 = vadd.f32 %v156, %v176
    %s178 = sld [smem:[#allocation2 + $0x14]]
    %v179 = vstv %s178
    %v180 = vadd.f32 %v177, %v179
    %v181 = vlaneseq
    %v182 = vshrl.u32 %v181, 7
    %v183 = vsub.s32 2, %v182
    %v184 = vrot.slane %v71, %v183
    %v185 = vsub.f32 %v180, %v184
    %v186 = vadd.f32 %v71, 1e-05
    %v187 = vrsqrt.pop %v186
    %v188 = vlaneseq
    %v189 = vshrl.u32 %v188, 7
    %v190 = vsub.s32 5, %v189
    %v191 = vrot.slane %v187, %v190
    %v192 = vmul.f32 %v185, %v191
    %193 = vst [vmem:[#allocation10] sm:$0xff] %v192
    %v194 = vld [vmem:[#allocation9] sm:$0xff]
    %v195 = vld [vmem:[#allocation9 + $0x8] sm:$0xff]
    %v196 = vld [vmem:[#allocation9 + $0x10] sm:$0xff]
    %v197 = vld [vmem:[#allocation9 + $0x18] sm:$0xff]
    %v198 = vld [vmem:[#allocation9 + $0x20] sm:$0xff]
    %v199 = vld [vmem:[#allocation9 + $0x28] sm:$0xff]
    %v200 = vld [vmem:[#allocation9 + $0x30] sm:$0xff]
    %v201 = vld [vmem:[#allocation9 + $0x38] sm:$0xff]
    %v202 = vld [vmem:[#allocation9 + $0x40] sm:$0xff]
    %v203 = vld [vmem:[#allocation9 + $0x48] sm:$0xff]
    %v204 = vld [vmem:[#allocation9 + $0x50] sm:$0xff]
    %v205 = vld [vmem:[#allocation9 + $0x58] sm:$0xff]
    %v206 = vld [vmem:[#allocation9 + $0x60] sm:$0xff]
    %v207 = vld [vmem:[#allocation9 + $0x68] sm:$0xff]
    %v208 = vld [vmem:[#allocation9 + $0x70] sm:$0xff]
    %v209 = vld [vmem:[#allocation9 + $0x78] sm:$0xff]
    %v210 = vlaneseq
    %v211 = vshrl.u32 %v210, 7
    %v212 = vsub.s32 0, %v211
    %v213 = vrot.slane %v71, %v212
    %214 = vmatprep.subr.mxu0 0.0
    %215 = vmatpush1.msra.mxu0 %v194
    %216 = vmatprep.subr.mxu0 0.0
    %217 = vmatpush1.msra.mxu0 %v195
    %218 = vmatprep.subr.mxu0 0.0
    %219 = vmatpush1.msra.mxu0 %v196
    %220 = vmatprep.subr.mxu0 0.0
    %221 = vmatpush1.msra.mxu0 %v197
    %222 = vmatprep.subr.mxu0 0.0
    %223 = vmatpush1.msra.mxu0 %v198
    %224 = vmatprep.subr.mxu0 0.0
    %225 = vmatpush1.msra.mxu0 %v199
    %226 = vmatprep.subr.mxu0 0.0
    %227 = vmatpush1.msra.mxu0 %v200
    %228 = vmatprep.subr.mxu0 0.0
    %229 = vmatpush1.msra.mxu0 %v201
    %230 = vmatprep.subr.mxu0 0.0
    %231 = vmatpush1.msra.mxu0 %v202
    %232 = vmatprep.subr.mxu0 0.0
    %233 = vmatpush1.msra.mxu0 %v203
    %234 = vmatprep.subr.mxu0 0.0
    %235 = vmatpush1.msra.mxu0 %v204
    %236 = vmatprep.subr.mxu0 0.0
    %237 = vmatpush1.msra.mxu0 %v205
    %238 = vmatprep.subr.mxu0 0.0
    %239 = vmatpush1.msra.mxu0 %v206
    %240 = vmatprep.subr.mxu0 0.0
    %241 = vmatpush1.msra.mxu0 %v207
    %242 = vmatprep.subr.mxu0 0.0
    %243 = vmatpush1.msra.mxu0 %v208
    %244 = vmatprep.subr.mxu0 0.0
    %245 = vmatpush1.msra.mxu0 %v209
    %246 = vmatprep.subr.mxu0 0.0
    %247 = vmatpush1.msra.mxu0 0.0
    %248 = vmatprep.subr.mxu0 0.0
    %249 = vmatpush1.msra.mxu0 0.0
    %250 = vmatprep.subr.mxu0 0.0
    %251 = vmatpush1.msra.mxu0 0.0
    %252 = vmatprep.subr.mxu0 0.0
    %253 = vmatpush1.msra.mxu0 0.0
    %254 = vmatprep.subr.mxu0 0.0
    %255 = vmatpush1.msra.mxu0 0.0
    %256 = vmatprep.subr.mxu0 0.0
    %257 = vmatpush1.msra.mxu0 0.0
    %258 = vmatprep.subr.mxu0 0.0
    %259 = vmatpush1.msra.mxu0 0.0
    %260 = vmatprep.subr.mxu0 0.0
    %261 = vmatpush1.msra.mxu0 0.0
    %262 = vmatprep.subr.mxu0 0.0
    %263 = vmatpush1.msra.mxu0 0.0
    %264 = vmatprep.subr.mxu0 0.0
    %265 = vmatpush1.msra.mxu0 0.0
    %266 = vmatprep.subr.mxu0 0.0
    %267 = vmatpush1.msra.mxu0 0.0
    %268 = vmatprep.subr.mxu0 0.0
    %269 = vmatpush1.msra.mxu0 0.0
    %270 = vmatprep.subr.mxu0 0.0
    %271 = vmatpush1.msra.mxu0 0.0
    %272 = vmatprep.subr.mxu0 0.0
    %273 = vmatpush1.msra.mxu0 0.0
    %274 = vmatprep.subr.mxu0 0.0
    %275 = vmatpush1.msra.mxu0 0.0
    %276 = vmatprep.subr.mxu0 0.0
    %277 = vmatpush1.msra.mxu0 0.0
    %278 = vmatprep.mubr.f32.mxu0 0.0
    %279 = vmatmul.mubr.f32.gmra.mrb[0].mxu0 %v180
    %v280 = vpop.f32.mrb[0].mxu0
    %v281 = vadd.f32 %v213, %v280
    %v282 = vpop.f32.mrb[0].mxu0
    %283 = vdwg.mxu0
    %v284 = vrot.slane %v281, 4
    %v285 = vadd.f32 %v281, %v284
    %v286 = vrot.slane %v285, 2
    %v287 = vadd.f32 %v285, %v286
    %v288 = vrot.slane %v287, 1
    %v289 = vadd.f32 %v287, %v288
    %v290 = vmul.f32 %v289, %v79
    %v291 = vsub.f32 %v281, %v290
    %v292 = vmul.f32 %v291, %v291
    %v293 = vrot.slane %v292, 4
    %v294 = vadd.f32 %v292, %v293
    %v295 = vrot.slane %v294, 2
    %v296 = vadd.f32 %v294, %v295
    %v297 = vrot.slane %v296, 1
    %v298 = vadd.f32 %v296, %v297
    %v299 = vmul.f32 %v298, %v79
    %v300 = vadd.f32 %v299, 1e-05
    %v301 = vrsqrt.pop %v300
    %v302 = vmul.f32 %v291, %v301
    %s303 = scalar_lea.vmem [#allocation7], 8
    %v304 = vld [vmem:[%s303] sm:$0xff]
    %v305 = vmul.f32 %v302, %v304
    %s306 = sld [smem:[#allocation2 + $0x15]]
    %v307 = vstv %s306
    %v308 = vmul.f32 %v302, %v307
    %s309 = sld [smem:[#allocation2 + $0x16]]
    %v310 = vstv %s309
    %v311 = vmul.f32 %v304, %v310
    %v312 = vadd.f32 %v308, %v311
    %s313 = sld [smem:[#allocation2 + $0x17]]
    %v314 = vstv %s313
    %v315 = vmul.f32 %v305, %v314
    %v316 = vadd.f32 %v312, %v315
    %s317 = sld [smem:[#allocation2 + $0x21]]
    %v318 = vstv %s317
    %v319 = vadd.f32 %v316, %v318
    %vm320 = vcmp.ge.f32.partialorder %v319, 0.0
    %v321 = vmul.f32 %v319, 0.1
    %v322 = vsel %vm320, %v319, %v321
    %s323 = sld [smem:[#allocation2 + $0x25]]
    %v324 = vstv %s323
    %v325 = vmul.f32 %v322, %v324
    %s326 = sld [smem:[#allocation2 + $0x18]]
    %v327 = vstv %s326
    %v328 = vmul.f32 %v302, %v327
    %s329 = sld [smem:[#allocation2 + $0x19]]
    %v330 = vstv %s329
    %v331 = vmul.f32 %v304, %v330
    %v332 = vadd.f32 %v328, %v331
    %s333 = sld [smem:[#allocation2 + $0x1a]]
    %v334 = vstv %s333
    %v335 = vmul.f32 %v305, %v334
    %v336 = vadd.f32 %v332, %v335
    %s337 = sld [smem:[#allocation2 + $0x22]]
    %v338 = vstv %s337
    %v339 = vadd.f32 %v336, %v338
    %vm340 = vcmp.ge.f32.partialorder %v339, 0.0
    %v341 = vmul.f32 %v339, 0.1
    %v342 = vsel %vm340, %v339, %v341
    %s343 = sld [smem:[#allocation2 + $0x26]]
    %v344 = vstv %s343
    %v345 = vmul.f32 %v342, %v344
    %v346 = vadd.f32 %v325, %v345
    %s347 = sld [smem:[#allocation2 + $0x1b]]
    %v348 = vstv %s347
    %v349 = vmul.f32 %v302, %v348
    %s350 = sld [smem:[#allocation2 + $0x1c]]
    %v351 = vstv %s350
    %v352 = vmul.f32 %v304, %v351
    %v353 = vadd.f32 %v349, %v352
    %s354 = sld [smem:[#allocation2 + $0x1d]]
    %v355 = vstv %s354
    %v356 = vmul.f32 %v305, %v355
    %v357 = vadd.f32 %v353, %v356
    %s358 = sld [smem:[#allocation2 + $0x23]]
    %v359 = vstv %s358
    %v360 = vadd.f32 %v357, %v359
    %vm361 = vcmp.ge.f32.partialorder %v360, 0.0
    %v362 = vmul.f32 %v360, 0.1
    %v363 = vsel %vm361, %v360, %v362
    %s364 = sld [smem:[#allocation2 + $0x27]]
    %v365 = vstv %s364
    %v366 = vmul.f32 %v363, %v365
    %v367 = vadd.f32 %v346, %v366
    %s368 = sld [smem:[#allocation2 + $0x1e]]
    %v369 = vstv %s368
    %v370 = vmul.f32 %v302, %v369
    %s371 = sld [smem:[#allocation2 + $0x1f]]
    %v372 = vstv %s371
    %v373 = vmul.f32 %v304, %v372
    %v374 = vadd.f32 %v370, %v373
    %s375 = sld [smem:[#allocation2 + $0x20]]
    %v376 = vstv %s375
    %v377 = vmul.f32 %v305, %v376
    %v378 = vadd.f32 %v374, %v377
    %s379 = sld [smem:[#allocation2 + $0x24]]
    %v380 = vstv %s379
    %v381 = vadd.f32 %v378, %v380
    %vm382 = vcmp.ge.f32.partialorder %v381, 0.0
    %v383 = vmul.f32 %v381, 0.1
    %v384 = vsel %vm382, %v381, %v383
    %s385 = sld [smem:[#allocation2 + $0x28]]
    %v386 = vstv %s385
    %v387 = vmul.f32 %v384, %v386
    %v388 = vadd.f32 %v367, %v387
    %s389 = sld [smem:[#allocation2 + $0x29]]
    %v390 = vstv %s389
    %v391 = vadd.f32 %v388, %v390
    %v392 = vlaneseq
    %v393 = vshrl.u32 %v392, 7
    %v394 = vsub.s32 3, %v393
    %v395 = vrot.slane %v71, %v394
    %v396 = vsub.f32 %v391, %v395
    %v397 = vlaneseq
    %v398 = vshrl.u32 %v397, 7
    %v399 = vsub.s32 6, %v398
    %v400 = vrot.slane %v187, %v399
    %v401 = vmul.f32 %v396, %v400
    %s402 = scalar_lea.vmem [#allocation10], 8
    %403 = vst [vmem:[%s402] sm:$0xff] %v401
    %s404 = scalar_lea.vmem [#allocation9], 128
    %v405 = vld [vmem:[%s404] sm:$0xff]
    %v406 = vld [vmem:[%s404 + $0x8] sm:$0xff]
    %v407 = vld [vmem:[%s404 + $0x10] sm:$0xff]
    %v408 = vld [vmem:[%s404 + $0x18] sm:$0xff]
    %v409 = vld [vmem:[%s404 + $0x20] sm:$0xff]
    %v410 = vld [vmem:[%s404 + $0x28] sm:$0xff]
    %v411 = vld [vmem:[%s404 + $0x30] sm:$0xff]
    %v412 = vld [vmem:[%s404 + $0x38] sm:$0xff]
    %v413 = vld [vmem:[%s404 + $0x40] sm:$0xff]
    %v414 = vld [vmem:[%s404 + $0x48] sm:$0xff]
    %v415 = vld [vmem:[%s404 + $0x50] sm:$0xff]
    %v416 = vld [vmem:[%s404 + $0x58] sm:$0xff]
    %v417 = vld [vmem:[%s404 + $0x60] sm:$0xff]
    %v418 = vld [vmem:[%s404 + $0x68] sm:$0xff]
    %v419 = vld [vmem:[%s404 + $0x70] sm:$0xff]
    %v420 = vld [vmem:[%s404 + $0x78] sm:$0xff]
    %v421 = vlaneseq
    %v422 = vshrl.u32 %v421, 7
    %v423 = vsub.s32 1, %v422
    %v424 = vrot.slane %v71, %v423
    %425 = vmatprep.subr.mxu0 0.0
    %426 = vmatpush1.msra.mxu0 %v405
    %427 = vmatprep.subr.mxu0 0.0
    %428 = vmatpush1.msra.mxu0 %v406
    %429 = vmatprep.subr.mxu0 0.0
    %430 = vmatpush1.msra.mxu0 %v407
    %431 = vmatprep.subr.mxu0 0.0
    %432 = vmatpush1.msra.mxu0 %v408
    %433 = vmatprep.subr.mxu0 0.0
    %434 = vmatpush1.msra.mxu0 %v409
    %435 = vmatprep.subr.mxu0 0.0
    %436 = vmatpush1.msra.mxu0 %v410
    %437 = vmatprep.subr.mxu0 0.0
    %438 = vmatpush1.msra.mxu0 %v411
    %439 = vmatprep.subr.mxu0 0.0
    %440 = vmatpush1.msra.mxu0 %v412
    %441 = vmatprep.subr.mxu0 0.0
    %442 = vmatpush1.msra.mxu0 %v413
    %443 = vmatprep.subr.mxu0 0.0
    %444 = vmatpush1.msra.mxu0 %v414
    %445 = vmatprep.subr.mxu0 0.0
    %446 = vmatpush1.msra.mxu0 %v415
    %447 = vmatprep.subr.mxu0 0.0
    %448 = vmatpush1.msra.mxu0 %v416
    %449 = vmatprep.subr.mxu0 0.0
    %450 = vmatpush1.msra.mxu0 %v417
    %451 = vmatprep.subr.mxu0 0.0
    %452 = vmatpush1.msra.mxu0 %v418
    %453 = vmatprep.subr.mxu0 0.0
    %454 = vmatpush1.msra.mxu0 %v419
    %455 = vmatprep.subr.mxu0 0.0
    %456 = vmatpush1.msra.mxu0 %v420
    %457 = vmatprep.subr.mxu0 0.0
    %458 = vmatpush1.msra.mxu0 0.0
    %459 = vmatprep.subr.mxu0 0.0
    %460 = vmatpush1.msra.mxu0 0.0
    %461 = vmatprep.subr.mxu0 0.0
    %462 = vmatpush1.msra.mxu0 0.0
    %463 = vmatprep.subr.mxu0 0.0
    %464 = vmatpush1.msra.mxu0 0.0
    %465 = vmatprep.subr.mxu0 0.0
    %466 = vmatpush1.msra.mxu0 0.0
    %467 = vmatprep.subr.mxu0 0.0
    %468 = vmatpush1.msra.mxu0 0.0
    %469 = vmatprep.subr.mxu0 0.0
    %470 = vmatpush1.msra.mxu0 0.0
    %471 = vmatprep.subr.mxu0 0.0
    %472 = vmatpush1.msra.mxu0 0.0
    %473 = vmatprep.subr.mxu0 0.0
    %474 = vmatpush1.msra.mxu0 0.0
    %475 = vmatprep.subr.mxu0 0.0
    %476 = vmatpush1.msra.mxu0 0.0
    %477 = vmatprep.subr.mxu0 0.0
    %478 = vmatpush1.msra.mxu0 0.0
    %479 = vmatprep.subr.mxu0 0.0
    %480 = vmatpush1.msra.mxu0 0.0
    %481 = vmatprep.subr.mxu0 0.0
    %482 = vmatpush1.msra.mxu0 0.0
    %483 = vmatprep.subr.mxu0 0.0
    %484 = vmatpush1.msra.mxu0 0.0
    %485 = vmatprep.subr.mxu0 0.0
    %486 = vmatpush1.msra.mxu0 0.0
    %487 = vmatprep.subr.mxu0 0.0
    %488 = vmatpush1.msra.mxu0 0.0
    %489 = vmatprep.mubr.f32.mxu0 0.0
    %490 = vmatmul.mubr.f32.gmra.mrb[0].mxu0 %v391
    %v491 = vpop.f32.mrb[0].mxu0
    %v492 = vadd.f32 %v424, %v491
    %v493 = vpop.f32.mrb[0].mxu0
    %494 = vdwg.mxu0
    %v495 = vrot.slane %v492, 4
    %v496 = vadd.f32 %v492, %v495
    %v497 = vrot.slane %v496, 2
    %v498 = vadd.f32 %v496, %v497
    %v499 = vrot.slane %v498, 1
    %v500 = vadd.f32 %v498, %v499
    %v501 = vmul.f32 %v500, %v79
    %v502 = vsub.f32 %v492, %v501
    %v503 = vmul.f32 %v502, %v502
    %v504 = vrot.slane %v503, 4
    %v505 = vadd.f32 %v503, %v504
    %v506 = vrot.slane %v505, 2
    %v507 = vadd.f32 %v505, %v506
    %v508 = vrot.slane %v507, 1
    %v509 = vadd.f32 %v507, %v508
    %v510 = vmul.f32 %v509, %v79
    %v511 = vadd.f32 %v510, 1e-05
    %v512 = vrsqrt.pop %v511
    %v513 = vmul.f32 %v502, %v512
    %s514 = scalar_lea.vmem [#allocation7], 16
    %v515 = vld [vmem:[%s514] sm:$0xff]
    %v516 = vmul.f32 %v513, %v515
    %s517 = sld [smem:[#allocation2 + $0x2a]]
    %v518 = vstv %s517
    %v519 = vmul.f32 %v513, %v518
    %s520 = sld [smem:[#allocation2 + $0x2b]]
    %v521 = vstv %s520
    %v522 = vmul.f32 %v515, %v521
    %v523 = vadd.f32 %v519, %v522
    %s524 = sld [smem:[#allocation2 + $0x2c]]
    %v525 = vstv %s524
    %v526 = vmul.f32 %v516, %v525
    %v527 = vadd.f32 %v523, %v526
    %s528 = sld [smem:[#allocation2 + $0x36]]
    %v529 = vstv %s528
    %v530 = vadd.f32 %v527, %v529
    %vm531 = vcmp.ge.f32.partialorder %v530, 0.0
    %v532 = vmul.f32 %v530, 0.1
    %v533 = vsel %vm531, %v530, %v532
    %s534 = sld [smem:[#allocation2 + $0x3a]]
    %v535 = vstv %s534
    %v536 = vmul.f32 %v533, %v535
    %s537 = sld [smem:[#allocation2 + $0x2d]]
    %v538 = vstv %s537
    %v539 = vmul.f32 %v513, %v538
    %s540 = sld [smem:[#allocation2 + $0x2e]]
    %v541 = vstv %s540
    %v542 = vmul.f32 %v515, %v541
    %v543 = vadd.f32 %v539, %v542
    %s544 = sld [smem:[#allocation2 + $0x2f]]
    %v545 = vstv %s544
    %v546 = vmul.f32 %v516, %v545
    %v547 = vadd.f32 %v543, %v546
    %s548 = sld [smem:[#allocation2 + $0x37]]
    %v549 = vstv %s548
    %v550 = vadd.f32 %v547, %v549
    %vm551 = vcmp.ge.f32.partialorder %v550, 0.0
    %v552 = vmul.f32 %v550, 0.1
    %v553 = vsel %vm551, %v550, %v552
    %s554 = sld [smem:[#allocation2 + $0x3b]]
    %v555 = vstv %s554
    %v556 = vmul.f32 %v553, %v555
    %v557 = vadd.f32 %v536, %v556
    %s558 = sld [smem:[#allocation2 + $0x30]]
    %v559 = vstv %s558
    %v560 = vmul.f32 %v513, %v559
    %s561 = sld [smem:[#allocation2 + $0x31]]
    %v562 = vstv %s561
    %v563 = vmul.f32 %v515, %v562
    %v564 = vadd.f32 %v560, %v563
    %s565 = sld [smem:[#allocation2 + $0x32]]
    %v566 = vstv %s565
    %v567 = vmul.f32 %v516, %v566
    %v568 = vadd.f32 %v564, %v567
    %s569 = sld [smem:[#allocation2 + $0x38]]
    %v570 = vstv %s569
    %v571 = vadd.f32 %v568, %v570
    %vm572 = vcmp.ge.f32.partialorder %v571, 0.0
    %v573 = vmul.f32 %v571, 0.1
    %v574 = vsel %vm572, %v571, %v573
    %s575 = sld [smem:[#allocation2 + $0x3c]]
    %v576 = vstv %s575
    %v577 = vmul.f32 %v574, %v576
    %v578 = vadd.f32 %v557, %v577
    %s579 = sld [smem:[#allocation2 + $0x33]]
    %v580 = vstv %s579
    %v581 = vmul.f32 %v513, %v580
    %s582 = sld [smem:[#allocation2 + $0x34]]
    %v583 = vstv %s582
    %v584 = vmul.f32 %v515, %v583
    %v585 = vadd.f32 %v581, %v584
    %s586 = sld [smem:[#allocation2 + $0x35]]
    %v587 = vstv %s586
    %v588 = vmul.f32 %v516, %v587
    %v589 = vadd.f32 %v585, %v588
    %s590 = sld [smem:[#allocation2 + $0x39]]
    %v591 = vstv %s590
    %v592 = vadd.f32 %v589, %v591
    %vm593 = vcmp.ge.f32.partialorder %v592, 0.0
    %v594 = vmul.f32 %v592, 0.1
    %v595 = vsel %vm593, %v592, %v594
    %s596 = sld [smem:[#allocation2 + $0x3d]]
    %v597 = vstv %s596
    %v598 = vmul.f32 %v595, %v597
    %v599 = vadd.f32 %v578, %v598
    %s600 = sld [smem:[#allocation2 + $0x3e]]
    %v601 = vstv %s600
    %v602 = vadd.f32 %v599, %v601
    %v603 = vlaneseq
    %v604 = vshrl.u32 %v603, 7
    %v605 = vsub.s32 4, %v604
    %v606 = vrot.slane %v71, %v605
    %v607 = vsub.f32 %v602, %v606
    %v608 = vlaneseq
    %v609 = vshrl.u32 %v608, 7
    %v610 = vsub.s32 7, %v609
    %v611 = vrot.slane %v187, %v610
    %v612 = vmul.f32 %v607, %v611
    %s613 = scalar_lea.vmem [#allocation10], 16
    %614 = vst [vmem:[%s613] sm:$0xff] %v612
    // Predicated region
    $region38: #{tpu_custom_call.1} parent=1 // pred_check
      _
    $region39: #{tpu_custom_call.1} parent=1 // pred_check_branch
      %616 = sbr.rel (0) target = $region41
    $region40: #{tpu_custom_call.1} parent=1 // pred_region
      %s618 = ssub.s32 384, 384
      %619 = vsyncadd [#allocation4], %s618
      %s620 = sshll.u32 [#allocation10], 4
      %s621 = int_to_ptr.vmem [resolvable:$true] %s620
      %626 = dma.vmem_to_hbm [thread:$0]  %s621, 384, %s5, [#allocation4], 128, 128, 8
    $region41: #{tpu_custom_call.1} parent=1 // pred_fallthru
      _
    // Predicated region
    $region42: #{tpu_custom_call.1} parent=1 // pred_check
      _
    $region43: #{tpu_custom_call.1} parent=1 // pred_check_branch
      %628 = sbr.rel (0) target = $region45
    $region44: #{tpu_custom_call.1} parent=1 // pred_region
      %629 = dma.done [#allocation4], 384
    $region45: #{tpu_custom_call.1} parent=1 // pred_fallthru
      _
    %630 = vsyncpa [#allocation3], 1
    %631 = vsyncpa [#allocation8], 1
    %632 = vsyncpa [#allocation4], 1
    %633 = vsyncpa [#allocation5], 1

</llo_original>
